<compile_context>
chip_gen: v7x
topology: tpu7x:2x2x1
jax: 0.10.0
libtpu: 0.0.40
codegen_flags: <defaults>
</compile_context>

<pallas_src>
import functools

import jax
import jax.numpy as jnp
from jax import lax
from jax.experimental import pallas as pl
from jax.experimental.pallas import tpu as pltpu


def attention_pm_kernel(x_ref, gamma_ref, beta_ref, wqkv_ref, wo_ref, o_ref, *,
                        heads, dim_head, eps, matmul_dtype):
    bblk, n, d = x_ref.shape
    inner = heads * dim_head

    xb = x_ref[...].astype(jnp.float32)                # (Bblk, N, D)

    # ---- LayerNorm over the feature axis (strictly f32: v5e has no bf16 VPU/EUP) ----
    mean = jnp.mean(xb, axis=-1, keepdims=True)
    var = jnp.mean(jnp.square(xb - mean), axis=-1, keepdims=True)
    xn = (xb - mean) * lax.rsqrt(var + eps)
    xn = xn * gamma_ref[...] + beta_ref[...]           # gamma/beta are (1, 1, D)

    # ---- Fused QKV projection: one lane-dense matmul for all heads & batch rows ----
    # Softmax scale is pre-folded into the q columns of wqkv (wrapper), so no O(N^2)
    # score scaling is needed later.
    x2 = xn.reshape(bblk * n, d).astype(matmul_dtype)                       # (Bblk*N, D)
    qkv = jnp.dot(x2, wqkv_ref[...], preferred_element_type=jnp.float32)    # (Bblk*N, 3*inner)
    qkv = qkv.reshape(bblk, n, 3 * inner)

    # ---- Per-head attention, batched over the batch block (no unroll over Bblk) ----
    # `heads` is a small, trace-time-fixed hyperparameter; the static loop is cheap.
    # TODO(synk): for large heads*Bblk switch this to a fori_loop / 4-D batched einsum.
    head_outs = []
    for h in range(heads):
        lo = h * dim_head
        q = qkv[:, :, lo:lo + dim_head]                                     # (Bblk, N, dh)
        k = qkv[:, :, inner + lo:inner + lo + dim_head]
        v = qkv[:, :, 2 * inner + lo:2 * inner + lo + dim_head]

        # q @ k^T without materializing a transpose (contract last dims of both).
        s = jnp.einsum('bqd,bkd->bqk', q.astype(matmul_dtype), k.astype(matmul_dtype),
                       preferred_element_type=jnp.float32)                  # (Bblk, N, N)

        # Softmax in f32: max-subtract, exp, EUP reciprocal + one Newton step.
        m = jnp.max(s, axis=-1, keepdims=True)
        e = jnp.exp(s - m)
        den = jnp.sum(e, axis=-1, keepdims=True)
        r = pl.reciprocal(den, approx=True)
        r = r * (2.0 - den * r)                        # Newton refinement (den >= 1)
        attn = e * r

        oh = jnp.einsum('bqk,bkd->bqd', attn.astype(matmul_dtype), v.astype(matmul_dtype),
                        preferred_element_type=jnp.float32)                 # (Bblk, N, dh)
        head_outs.append(oh)

    # ---- Fused output projection: lane-concat heads, one matmul ----
    oc = head_outs[0] if heads == 1 else jnp.concatenate(head_outs, axis=-1)  # (Bblk, N, inner)
    oc = oc.reshape(bblk * n, inner).astype(matmul_dtype)
    out = jnp.dot(oc, wo_ref[...], preferred_element_type=jnp.float32)         # (Bblk*N, D)
    out = out.reshape(bblk, n, d)

    # ---- Lane-dense store: assemble (Bblk, 1, N*D) and write full 128-wide lanes ----
    # (lane concat is XLU work on an otherwise idle slot; the unmasked store replaces
    #  N masked 32-lane vst.msk partial stores per batch row).
    rows = [out[:, i:i + 1, :] for i in range(n)]       # each (Bblk, 1, D)
    wide = rows[0] if n == 1 else jnp.concatenate(rows, axis=-1)   # (Bblk, 1, N*D)
    o_ref[...] = wide.astype(o_ref.dtype)


def attention_pm(x, gamma, beta, w_qkv, w_out, *, heads, dim_head, eps=1e-5,
                 matmul_dtype=jnp.bfloat16, block_b=None):
    """x: (B, N, D); w_qkv: (D, 3*heads*dim_head); w_out: (heads*dim_head, D)."""
    B, N, D = x.shape
    inner = heads * dim_head
    assert w_qkv.shape == (D, 3 * inner)
    assert w_out.shape == (inner, D)
    scale = dim_head ** (-0.5)

    # Keep the fused (D, 3*inner) QKV weight layout; fold the softmax scale into the
    # q columns and cast to the MXU operand dtype (halves weight DMA when bf16).
    wqkv = jnp.concatenate([w_qkv[:, :inner] * scale, w_qkv[:, inner:]],
                           axis=-1).astype(matmul_dtype)                    # (D, 3*inner)
    wo = w_out.astype(matmul_dtype)                                         # (inner, D)
    gamma3 = gamma.reshape(1, 1, D).astype(jnp.float32)
    beta3 = beta.reshape(1, 1, D).astype(jnp.float32)

    itemsize = x.dtype.itemsize

    # ---- block_b from a VMEM budget (not a fixed list) ----
    # bytes per batch row in the block: input tile + output tile (same dtype); assume
    # 2x double buffering + slack.  16 MiB is the conservative scoped default (v5e).
    vmem_budget = 16 * 1024 * 1024
    per_row_bytes = 2 * N * D * itemsize
    max_rows = max(1, vmem_budget // (4 * per_row_bytes))
    if block_b is None:
        block_b = 1
        for cand in range(min(B, int(max_rows)), 0, -1):
            if B % cand == 0:
                block_b = cand
                break
        # Keep >= 2 grid steps along the "parallel" axis so both v7x TensorCores get work.
        if B // block_b < 2 and B >= 2:
            for cand in range(B // 2, 0, -1):
                if B % cand == 0:
                    block_b = cand
                    break
    assert B % block_b == 0

    weight_bytes = (wqkv.size + wo.size) * jnp.dtype(matmul_dtype).itemsize
    block_bytes = 2 * block_b * N * D * itemsize
    # Explicit VMEM limit (<= 64 MiB so it is also valid on v7x's smaller VMEM).
    vmem_limit = int(min(64 << 20, max(32 << 20, 4 * block_bytes + weight_bytes + (4 << 20))))

    cost = pl.CostEstimate(
        flops=int(2 * B * N * (3 * D * inner + 2 * N * inner + inner * D)),
        transcendentals=int(B * heads * N * N),
        bytes_accessed=int(x.size * itemsize + weight_bytes + B * N * D * itemsize),
    )

    kernel = functools.partial(attention_pm_kernel, heads=heads, dim_head=dim_head,
                               eps=eps, matmul_dtype=matmul_dtype)

    out_wide = pl.pallas_call(
        kernel,
        out_shape=jax.ShapeDtypeStruct((B, 1, N * D), x.dtype),
        grid_spec=pltpu.PrefetchScalarGridSpec(
            num_scalar_prefetch=0,
            grid=(B // block_b,),
            in_specs=[
                pl.BlockSpec((block_b, N, D), lambda b: (b, 0, 0)),      # x
                pl.BlockSpec((1, 1, D), lambda b: (0, 0, 0)),            # LN gamma
                pl.BlockSpec((1, 1, D), lambda b: (0, 0, 0)),            # LN beta
                pl.BlockSpec((D, 3 * inner), lambda b: (0, 0)),          # fused Wqkv (q-scaled)
                pl.BlockSpec((inner, D), lambda b: (0, 0)),              # Wout
            ],
            out_specs=pl.BlockSpec((block_b, 1, N * D), lambda b: (b, 0, 0)),  # lane-dense
        ),
        compiler_params=pltpu.CompilerParams(
            dimension_semantics=("parallel",),
            vmem_limit_bytes=vmem_limit),
        cost_estimate=cost,
    )(x, gamma3, beta3, wqkv, wo)

    return out_wide.reshape(B, N, D)


def attention_pm_ref(x, gamma, beta, w_qkv, w_out, *, heads, dim_head, eps=1e-5):
    """Pure-JAX reference mirroring the PyTorch forward."""
    B, N, D = x.shape
    inner = heads * dim_head
    mean = jnp.mean(x, axis=-1, keepdims=True)
    var = jnp.mean(jnp.square(x - mean), axis=-1, keepdims=True)
    xn = (x - mean) / jnp.sqrt(var + eps) * gamma + beta
    qkv = xn @ w_qkv
    q, k, v = jnp.split(qkv, 3, axis=-1)

    def split_heads(t):
        return t.reshape(B, N, heads, dim_head).transpose(0, 2, 1, 3)  # b h n d

    q, k, v = map(split_heads, (q, k, v))
    dots = jnp.einsum("bhnd,bhmd->bhnm", q, k) * (dim_head ** -0.5)
    attn = jax.nn.softmax(dots, axis=-1)
    out = jnp.einsum("bhnm,bhmd->bhnd", attn, v)
    out = out.transpose(0, 2, 1, 3).reshape(B, N, inner)
    return out @ w_out


if __name__ == "__main__":
    # Small shapes consistent with the module: dim=32, heads=2, dim_head=16 -> inner_dim=32
    B, N, D = 2, 8, 32
    heads, dim_head = 2, 16
    inner = heads * dim_head

    key = jax.random.PRNGKey(0)
    kx, kq, ko, kg, kb = jax.random.split(key, 5)

    x = jax.random.normal(kx, (B, N, D), dtype=jnp.float32)
    w_qkv = jax.random.normal(kq, (D, 3 * inner), dtype=jnp.float32) * (D ** -0.5)
    w_out = jax.random.normal(ko, (inner, D), dtype=jnp.float32) * (inner ** -0.5)
    gamma = jnp.ones((D,), dtype=jnp.float32) + 0.1 * jax.random.normal(kg, (D,), dtype=jnp.float32)
    beta = 0.1 * jax.random.normal(kb, (D,), dtype=jnp.float32)

    ref = attention_pm_ref(x, gamma, beta, w_qkv, w_out, heads=heads, dim_head=dim_head)

    # f32 MXU operands: matches the reference to tight tolerance.
    out_f32 = attention_pm(x, gamma, beta, w_qkv, w_out, heads=heads, dim_head=dim_head,
                           matmul_dtype=jnp.float32)
    out_f32 = jax.block_until_ready(out_f32)
    assert out_f32.shape == (B, N, D)
    assert jnp.allclose(out_f32, ref, atol=1e-4, rtol=1e-4), "f32 path mismatch vs reference"

    # Default path: bf16 MXU operands / f32 accumulation (native fast path on all gens).
    # Dominant bf16-path error is the cast of attention probs before attn@V -> 5e-2 tol.
    out_bf16 = attention_pm(x, gamma, beta, w_qkv, w_out, heads=heads, dim_head=dim_head)
    out_bf16 = jax.block_until_ready(out_bf16)
    assert out_bf16.shape == (B, N, D)
    assert jnp.allclose(out_bf16, ref, atol=5e-2, rtol=5e-2), "bf16 path mismatch vs reference"

    print("KERNEL_OK")
</pallas_src>

<mosaic_0001>
module attributes {stable_mosaic.version = 11 : i64} {
  func.func @attention_pm_kernel(%arg0: i32, %arg1: memref<1x8x32xf32, #tpu.memory_space<vmem>>, %arg2: memref<1x1x32xf32, #tpu.memory_space<vmem>>, %arg3: memref<1x1x32xf32, #tpu.memory_space<vmem>>, %arg4: memref<32x96xf32, #tpu.memory_space<vmem>>, %arg5: memref<32x32xf32, #tpu.memory_space<vmem>>, %arg6: memref<1x1x256xf32, #tpu.memory_space<vmem>>) attributes {dimension_semantics = [#tpu.dimension_semantics<parallel>], iteration_bounds = array<i64: 2>, scalar_prefetch = 0 : i64, scratch_operands = 0 : i64, tpu.core_type = #tpu.core_type<tc>, window_params = [{transform_indices = @transform_0, window_bounds = array<i64: 1, 8, 32>}, {pipeline_mode = #tpu.pipeline_mode<synchronous>, transform_indices = @transform_1, window_bounds = array<i64: 1, 1, 32>}, {pipeline_mode = #tpu.pipeline_mode<synchronous>, transform_indices = @transform_2, window_bounds = array<i64: 1, 1, 32>}, {pipeline_mode = #tpu.pipeline_mode<synchronous>, transform_indices = @transform_3, window_bounds = array<i64: 32, 96>}, {pipeline_mode = #tpu.pipeline_mode<synchronous>, transform_indices = @transform_4, window_bounds = array<i64: 32, 32>}, {transform_indices = @transform_5, window_bounds = array<i64: 1, 1, 256>}]} {
    %c0 = arith.constant 0 : index
    %c0_0 = arith.constant 0 : index
    %c0_1 = arith.constant 0 : index
    %0 = vector.load %arg1[%c0, %c0_0, %c0_1] : memref<1x8x32xf32, #tpu.memory_space<vmem>>, vector<1x8x32xf32>
    %cst = arith.constant dense<0.000000e+00> : vector<1x8xf32>
    %1 = vector.multi_reduction <add>, %0, %cst [2] : vector<1x8x32xf32> to vector<1x8xf32>
    %2 = vector.shape_cast %1 : vector<1x8xf32> to vector<1x8x1xf32>
    %cst_2 = arith.constant 3.200000e+01 : f32
    %3 = vector.broadcast %cst_2 : f32 to vector<1x8x1xf32>
    %4 = arith.divf %2, %3 : vector<1x8x1xf32>
    %5 = vector.broadcast %4 : vector<1x8x1xf32> to vector<1x8x32xf32>
    %6 = arith.subf %0, %5 : vector<1x8x32xf32>
    %7 = arith.mulf %6, %6 : vector<1x8x32xf32>
    %cst_3 = arith.constant dense<0.000000e+00> : vector<1x8xf32>
    %8 = vector.multi_reduction <add>, %7, %cst_3 [2] : vector<1x8x32xf32> to vector<1x8xf32>
    %9 = vector.shape_cast %8 : vector<1x8xf32> to vector<1x8x1xf32>
    %cst_4 = arith.constant 3.200000e+01 : f32
    %10 = vector.broadcast %cst_4 : f32 to vector<1x8x1xf32>
    %11 = arith.divf %9, %10 : vector<1x8x1xf32>
    %12 = vector.broadcast %4 : vector<1x8x1xf32> to vector<1x8x32xf32>
    %13 = arith.subf %0, %12 : vector<1x8x32xf32>
    %cst_5 = arith.constant 9.99999974E-6 : f32
    %14 = vector.broadcast %cst_5 : f32 to vector<1x8x1xf32>
    %15 = arith.addf %11, %14 : vector<1x8x1xf32>
    %16 = math.rsqrt %15 : vector<1x8x1xf32>
    %17 = vector.broadcast %16 : vector<1x8x1xf32> to vector<1x8x32xf32>
    %18 = arith.mulf %13, %17 : vector<1x8x32xf32>
    %c0_6 = arith.constant 0 : index
    %c0_7 = arith.constant 0 : index
    %c0_8 = arith.constant 0 : index
    %19 = vector.load %arg2[%c0_6, %c0_7, %c0_8] : memref<1x1x32xf32, #tpu.memory_space<vmem>>, vector<1x1x32xf32>
    %20 = vector.broadcast %19 : vector<1x1x32xf32> to vector<1x8x32xf32>
    %21 = arith.mulf %18, %20 : vector<1x8x32xf32>
    %c0_9 = arith.constant 0 : index
    %c0_10 = arith.constant 0 : index
    %c0_11 = arith.constant 0 : index
    %22 = vector.load %arg3[%c0_9, %c0_10, %c0_11] : memref<1x1x32xf32, #tpu.memory_space<vmem>>, vector<1x1x32xf32>
    %23 = vector.broadcast %22 : vector<1x1x32xf32> to vector<1x8x32xf32>
    %24 = arith.addf %21, %23 : vector<1x8x32xf32>
    %25 = vector.shape_cast %24 : vector<1x8x32xf32> to vector<8x32xf32>
    %c0_12 = arith.constant 0 : index
    %c0_13 = arith.constant 0 : index
    %26 = vector.load %arg4[%c0_12, %c0_13] : memref<32x96xf32, #tpu.memory_space<vmem>>, vector<32x96xf32>
    %cst_14 = arith.constant dense<0.000000e+00> : vector<8x96xf32>
    %27 = tpu.matmul %25, %26, %cst_14 {dimension_numbers = #tpu.dot_dimension_numbers<[1], [0], [0], [1], [0, 0, 1, 1], [], []>} : vector<8x32xf32>, vector<32x96xf32>, vector<8x96xf32> -> vector<8x96xf32>
    %28 = vector.shape_cast %27 : vector<8x96xf32> to vector<1x8x96xf32>
    %29 = vector.extract_strided_slice %28 {offsets = [0, 0, 0], sizes = [1, 8, 16], strides = [1, 1, 1]} : vector<1x8x96xf32> to vector<1x8x16xf32>
    %30 = vector.extract_strided_slice %28 {offsets = [0, 0, 32], sizes = [1, 8, 16], strides = [1, 1, 1]} : vector<1x8x96xf32> to vector<1x8x16xf32>
    %31 = vector.extract_strided_slice %28 {offsets = [0, 0, 64], sizes = [1, 8, 16], strides = [1, 1, 1]} : vector<1x8x96xf32> to vector<1x8x16xf32>
    "tpu.trace_start"() <{level = 10 : i32, message = "bqd,bkd->bqk"}> : () -> ()
    %cst_15 = arith.constant dense<0.000000e+00> : vector<1x8x8xf32>
    %32 = tpu.matmul %29, %30, %cst_15 {dimension_numbers = #tpu.dot_dimension_numbers<[2], [2], [1], [1], [0, 0, 0, 1, 1, 1], [0], [0]>} : vector<1x8x16xf32>, vector<1x8x16xf32>, vector<1x8x8xf32> -> vector<1x8x8xf32>
    "tpu.trace_stop"() : () -> ()
    %cst_16 = arith.constant dense<0xFF800000> : vector<1x8xf32>
    %33 = vector.multi_reduction <maximumf>, %32, %cst_16 [2] : vector<1x8x8xf32> to vector<1x8xf32>
    %34 = vector.shape_cast %33 : vector<1x8xf32> to vector<1x8x1xf32>
    %35 = vector.broadcast %34 : vector<1x8x1xf32> to vector<1x8x8xf32>
    %36 = arith.subf %32, %35 : vector<1x8x8xf32>
    %37 = math.exp %36 : vector<1x8x8xf32>
    %cst_17 = arith.constant dense<0.000000e+00> : vector<1x8xf32>
    %38 = vector.multi_reduction <add>, %37, %cst_17 [2] : vector<1x8x8xf32> to vector<1x8xf32>
    %39 = vector.shape_cast %38 : vector<1x8xf32> to vector<1x8x1xf32>
    %40 = tpu.reciprocal %39 {approx = true} : vector<1x8x1xf32> -> vector<1x8x1xf32>
    %41 = arith.mulf %39, %40 : vector<1x8x1xf32>
    %cst_18 = arith.constant 2.000000e+00 : f32
    %42 = vector.broadcast %cst_18 : f32 to vector<1x8x1xf32>
    %43 = arith.subf %42, %41 : vector<1x8x1xf32>
    %44 = arith.mulf %40, %43 : vector<1x8x1xf32>
    %45 = vector.broadcast %44 : vector<1x8x1xf32> to vector<1x8x8xf32>
    %46 = arith.mulf %37, %45 : vector<1x8x8xf32>
    "tpu.trace_start"() <{level = 10 : i32, message = "bqk,bkd->bqd"}> : () -> ()
    %cst_19 = arith.constant dense<0.000000e+00> : vector<1x8x16xf32>
    %47 = tpu.matmul %46, %31, %cst_19 {dimension_numbers = #tpu.dot_dimension_numbers<[2], [1], [1], [2], [0, 0, 0, 1, 1, 2], [0], [0]>} : vector<1x8x8xf32>, vector<1x8x16xf32>, vector<1x8x16xf32> -> vector<1x8x16xf32>
    "tpu.trace_stop"() : () -> ()
    %48 = vector.extract_strided_slice %28 {offsets = [0, 0, 16], sizes = [1, 8, 16], strides = [1, 1, 1]} : vector<1x8x96xf32> to vector<1x8x16xf32>
    %49 = vector.extract_strided_slice %28 {offsets = [0, 0, 48], sizes = [1, 8, 16], strides = [1, 1, 1]} : vector<1x8x96xf32> to vector<1x8x16xf32>
    %50 = vector.extract_strided_slice %28 {offsets = [0, 0, 80], sizes = [1, 8, 16], strides = [1, 1, 1]} : vector<1x8x96xf32> to vector<1x8x16xf32>
    "tpu.trace_start"() <{level = 10 : i32, message = "bqd,bkd->bqk"}> : () -> ()
    %cst_20 = arith.constant dense<0.000000e+00> : vector<1x8x8xf32>
    %51 = tpu.matmul %48, %49, %cst_20 {dimension_numbers = #tpu.dot_dimension_numbers<[2], [2], [1], [1], [0, 0, 0, 1, 1, 1], [0], [0]>} : vector<1x8x16xf32>, vector<1x8x16xf32>, vector<1x8x8xf32> -> vector<1x8x8xf32>
    "tpu.trace_stop"() : () -> ()
    %cst_21 = arith.constant dense<0xFF800000> : vector<1x8xf32>
    %52 = vector.multi_reduction <maximumf>, %51, %cst_21 [2] : vector<1x8x8xf32> to vector<1x8xf32>
    %53 = vector.shape_cast %52 : vector<1x8xf32> to vector<1x8x1xf32>
    %54 = vector.broadcast %53 : vector<1x8x1xf32> to vector<1x8x8xf32>
    %55 = arith.subf %51, %54 : vector<1x8x8xf32>
    %56 = math.exp %55 : vector<1x8x8xf32>
    %cst_22 = arith.constant dense<0.000000e+00> : vector<1x8xf32>
    %57 = vector.multi_reduction <add>, %56, %cst_22 [2] : vector<1x8x8xf32> to vector<1x8xf32>
    %58 = vector.shape_cast %57 : vector<1x8xf32> to vector<1x8x1xf32>
    %59 = tpu.reciprocal %58 {approx = true} : vector<1x8x1xf32> -> vector<1x8x1xf32>
    %60 = arith.mulf %58, %59 : vector<1x8x1xf32>
    %cst_23 = arith.constant 2.000000e+00 : f32
    %61 = vector.broadcast %cst_23 : f32 to vector<1x8x1xf32>
    %62 = arith.subf %61, %60 : vector<1x8x1xf32>
    %63 = arith.mulf %59, %62 : vector<1x8x1xf32>
    %64 = vector.broadcast %63 : vector<1x8x1xf32> to vector<1x8x8xf32>
    %65 = arith.mulf %56, %64 : vector<1x8x8xf32>
    "tpu.trace_start"() <{level = 10 : i32, message = "bqk,bkd->bqd"}> : () -> ()
    %cst_24 = arith.constant dense<0.000000e+00> : vector<1x8x16xf32>
    %66 = tpu.matmul %65, %50, %cst_24 {dimension_numbers = #tpu.dot_dimension_numbers<[2], [1], [1], [2], [0, 0, 0, 1, 1, 2], [0], [0]>} : vector<1x8x8xf32>, vector<1x8x16xf32>, vector<1x8x16xf32> -> vector<1x8x16xf32>
    "tpu.trace_stop"() : () -> ()
    %67 = tpu.concatenate %47, %66 in 2 : vector<1x8x16xf32>, vector<1x8x16xf32> -> vector<1x8x32xf32>
    %68 = vector.shape_cast %67 : vector<1x8x32xf32> to vector<8x32xf32>
    %c0_25 = arith.constant 0 : index
    %c0_26 = arith.constant 0 : index
    %69 = vector.load %arg5[%c0_25, %c0_26] : memref<32x32xf32, #tpu.memory_space<vmem>>, vector<32x32xf32>
    %cst_27 = arith.constant dense<0.000000e+00> : vector<8x32xf32>
    %70 = tpu.matmul %68, %69, %cst_27 {dimension_numbers = #tpu.dot_dimension_numbers<[1], [0], [0], [1], [0, 0, 1, 1], [], []>} : vector<8x32xf32>, vector<32x32xf32>, vector<8x32xf32> -> vector<8x32xf32>
    %71 = vector.shape_cast %70 : vector<8x32xf32> to vector<1x8x32xf32>
    %72 = vector.extract_strided_slice %71 {offsets = [0, 0, 0], sizes = [1, 1, 32], strides = [1, 1, 1]} : vector<1x8x32xf32> to vector<1x1x32xf32>
    %73 = vector.extract_strided_slice %71 {offsets = [0, 1, 0], sizes = [1, 1, 32], strides = [1, 1, 1]} : vector<1x8x32xf32> to vector<1x1x32xf32>
    %74 = vector.extract_strided_slice %71 {offsets = [0, 2, 0], sizes = [1, 1, 32], strides = [1, 1, 1]} : vector<1x8x32xf32> to vector<1x1x32xf32>
    %75 = vector.extract_strided_slice %71 {offsets = [0, 3, 0], sizes = [1, 1, 32], strides = [1, 1, 1]} : vector<1x8x32xf32> to vector<1x1x32xf32>
    %76 = vector.extract_strided_slice %71 {offsets = [0, 4, 0], sizes = [1, 1, 32], strides = [1, 1, 1]} : vector<1x8x32xf32> to vector<1x1x32xf32>
    %77 = vector.extract_strided_slice %71 {offsets = [0, 5, 0], sizes = [1, 1, 32], strides = [1, 1, 1]} : vector<1x8x32xf32> to vector<1x1x32xf32>
    %78 = vector.extract_strided_slice %71 {offsets = [0, 6, 0], sizes = [1, 1, 32], strides = [1, 1, 1]} : vector<1x8x32xf32> to vector<1x1x32xf32>
    %79 = vector.extract_strided_slice %71 {offsets = [0, 7, 0], sizes = [1, 1, 32], strides = [1, 1, 1]} : vector<1x8x32xf32> to vector<1x1x32xf32>
    %80 = tpu.concatenate %72, %73, %74, %75, %76, %77, %78, %79 in 2 : vector<1x1x32xf32>, vector<1x1x32xf32>, vector<1x1x32xf32>, vector<1x1x32xf32>, vector<1x1x32xf32>, vector<1x1x32xf32>, vector<1x1x32xf32>, vector<1x1x32xf32> -> vector<1x1x256xf32>
    %c0_28 = arith.constant 0 : index
    %c0_29 = arith.constant 0 : index
    %c0_30 = arith.constant 0 : index
    %81 = vector.load %arg6[%c0_28, %c0_29, %c0_30] : memref<1x1x256xf32, #tpu.memory_space<vmem>>, vector<1x1x256xf32>
    tpu.vector_store %arg6[%c0_28, %c0_29, %c0_30], %80 {strides = array<i32>} : memref<1x1x256xf32, #tpu.memory_space<vmem>>, vector<1x1x256xf32>,
    return
  }
  func.func @transform_0(%arg0: i32) -> (i32, i32, i32) {
    %c0_i32 = arith.constant 0 : i32
    %c0_i32_0 = arith.constant 0 : i32
    %c0_i32_1 = arith.constant 0 : i32
    return %arg0, %c0_i32, %c0_i32_0 : i32, i32, i32
  }
  func.func @transform_1(%arg0: i32) -> (i32, i32, i32) {
    %c0_i32 = arith.constant 0 : i32
    %c0_i32_0 = arith.constant 0 : i32
    %c0_i32_1 = arith.constant 0 : i32
    %c0_i32_2 = arith.constant 0 : i32
    return %c0_i32, %c0_i32_0, %c0_i32_1 : i32, i32, i32
  }
  func.func @transform_2(%arg0: i32) -> (i32, i32, i32) {
    %c0_i32 = arith.constant 0 : i32
    %c0_i32_0 = arith.constant 0 : i32
    %c0_i32_1 = arith.constant 0 : i32
    %c0_i32_2 = arith.constant 0 : i32
    return %c0_i32, %c0_i32_0, %c0_i32_1 : i32, i32, i32
  }
  func.func @transform_3(%arg0: i32) -> (i32, i32) {
    %c0_i32 = arith.constant 0 : i32
    %c0_i32_0 = arith.constant 0 : i32
    %c0_i32_1 = arith.constant 0 : i32
    return %c0_i32, %c0_i32_0 : i32, i32
  }
  func.func @transform_4(%arg0: i32) -> (i32, i32) {
    %c0_i32 = arith.constant 0 : i32
    %c0_i32_0 = arith.constant 0 : i32
    %c0_i32_1 = arith.constant 0 : i32
    return %c0_i32, %c0_i32_0 : i32, i32
  }
  func.func @transform_5(%arg0: i32) -> (i32, i32, i32) {
    %c0_i32 = arith.constant 0 : i32
    %c0_i32_0 = arith.constant 0 : i32
    %c0_i32_1 = arith.constant 0 : i32
    return %arg0, %c0_i32, %c0_i32_0 : i32, i32, i32
  }
}

</mosaic_0001>

<llo_original>
// kernel: tpu_custom_call.1
$region0: #{tpu_custom_call.1}
  #allocation0 [shape = 'u32[]', space=smem, size = 0x4, offset = 0x4, fixed_abs, tag = 'smem constant byte address 0x4 - core index']
  #allocation1 [shape = 'u32[144,128]{1,0:T(1,128)}', space=vmem, size = 0x12000, scoped, tag = 'internal scratch']
  %s0 = inlined_call_operand.hbm [shape: f32[2,8,32], index: 0, kind: input, shape index: {}]
  %s1 = inlined_call_operand.vmem [shape: f32[1,1,32], index: 1, kind: input, shape index: {}]
  %s2 = inlined_call_operand.vmem [shape: f32[1,1,32], index: 2, kind: input, shape index: {}]
  %s3 = inlined_call_operand.hbm [shape: f32[32,96], index: 3, kind: input, shape index: {}]
  %s4 = inlined_call_operand.hbm [shape: f32[32,32], index: 4, kind: input, shape index: {}]
  %s5 = inlined_call_operand.hbm [shape: f32[2,1,256], index: 5, kind: output, shape index: {}]
  %s6 = sld [smem:[#allocation0]]
  $region65: #{tpu_custom_call.1} parent=0
    _
  %s8 = ssub.s32 1, %s6
  %s9 = scalar_select 0, %s8, %s6
  $region1: #{tpu_custom_call.1} parent=0
    #allocation2 [shape = 'u8[8192]{0}', space=vmem, size = 0x2000, scoped, tag = 'input window, operand 0']
    #allocation3 [shape = 's32[2]{0}', space=sflag, size = 0x8, scoped, tag = 'scoped memory for tpu_custom_call.1']
    #allocation4 [shape = 's32[2]{0}', space=sflag, size = 0x8, scoped, tag = 'scoped memory for tpu_custom_call.1']
    #allocation5 [shape = 'u8[16384]{0}', space=vmem, size = 0x4000, scoped, tag = 'input window, operand 3, single buffered']
    #allocation6 [shape = 's32[1]{0}', space=sflag, size = 0x4, scoped, tag = 'scoped memory for tpu_custom_call.1']
    #allocation7 [shape = 'u8[16384]{0}', space=vmem, size = 0x4000, scoped, tag = 'input window, operand 4, single buffered']
    #allocation8 [shape = 'u8[2048]{0}', space=vmem, size = 0x800, scoped, tag = 'output window, operand 0']
    %10 = vsyncpa [#allocation3], 0
    %s11 = scalar_lea.sflag [#allocation3], 1
    %12 = vsyncpa %s11, 0
    %13 = vsyncpa [#allocation6], 0
    %14 = vsyncpa [#allocation4], 0
    %s15 = scalar_lea.sflag [#allocation4], 1
    %16 = vsyncpa %s15, 0
    loop: start=0, step=1, limit=4
    $region2: #{tpu_custom_call.1} parent=1 // loop_pre_header
      _
    $region3: #{tpu_custom_call.1} parent=1 // loop_header
      %s18 = sphi 0, %s22
      %p19 = scmp.ge.s32.totalorder %s18, 4
      %s28 = sphi 0, %s30
      %s31 = sphi 0, %s28
      %s32 = sphi 0, %s31
      %s48 = sphi 0, %s32
      %s52 = sphi 0, %s52
      %s54 = sphi 0, %s52
      %s55 = sphi 0, %s54
      %s69 = sphi 0, %s55
      %s73 = sphi 0, %s73
      %s75 = sphi 0, %s73
      %s76 = sphi 0, %s75
      %s90 = sphi 0, %s76
      %s94 = sphi 0, %s94
      %s96 = sphi 0, %s94
      %s97 = sphi 0, %s96
      %s111 = sphi 0, %s97
      %s115 = sphi 0, %s115
      %s117 = sphi 0, %s115
      %s118 = sphi 0, %s117
      %s132 = sphi 0, %s118
      %s138 = sphi 0, %s140
      %s141 = sphi 0, %s138
      %s142 = sphi 0, %s141
      %s158 = sphi 0, %s142
    $region4: #{tpu_custom_call.1} parent=1 // loop_header_branch
      %21 = sbr.rel (%p19) target = $region8
    $region5: #{tpu_custom_call.1} parent=1 // loop_body
      %s23 = ssub.s32 %s18, 1
      %s24 = ssub.s32 %s18, 2
      %s25 = sadd.s32 %s18, 1
      %s26 = ssub.s32 %s18, %s25
      %p27 = scmp.eq.s32.totalorder %s26, 0
      %s29 = sadd.s32 %s28, 1
      %s30 = scalar_select %p27, %s28, %s29
      %p33 = pneg %p27
      %p34 = scmp.eq.s32.totalorder %s18, 1
      %p35 = por %p33, %p34
      %p36 = scmp.ne.s32.totalorder %s28, %s31
      %p37 = scmp.eq.s32.totalorder %s18, 0
      %p38 = por %p36, %p37
      %p39 = scmp.ne.s32.totalorder %s28, %s31
      %p40 = scmp.eq.s32.totalorder %s23, 1
      %p41 = por %p39, %p40
      %p42 = scmp.ne.s32.totalorder %s31, %s32
      %p43 = scmp.eq.s32.totalorder %s23, 0
      %p44 = por %p42, %p43
      %p45 = scmp.ne.s32.totalorder %s31, %s32
      %p46 = scmp.eq.s32.totalorder %s24, 1
      %p47 = por %p45, %p46
      %p49 = scmp.ne.s32.totalorder %s32, %s48
      %p50 = scmp.eq.s32.totalorder %s24, 0
      %p51 = por %p49, %p50
      %s53 = sadd.s32 %s52, 1
      %p56 = scmp.eq.s32.totalorder %s18, 1
      %p57 = scmp.ne.s32.totalorder %s52, %s54
      %p58 = scmp.eq.s32.totalorder %s18, 0
      %p59 = por %p57, %p58
      %p60 = scmp.ne.s32.totalorder %s52, %s54
      %p61 = scmp.eq.s32.totalorder %s23, 1
      %p62 = por %p60, %p61
      %p63 = scmp.ne.s32.totalorder %s54, %s55
      %p64 = scmp.eq.s32.totalorder %s23, 0
      %p65 = por %p63, %p64
      %p66 = scmp.ne.s32.totalorder %s54, %s55
      %p67 = scmp.eq.s32.totalorder %s24, 1
      %p68 = por %p66, %p67
      %p70 = scmp.ne.s32.totalorder %s55, %s69
      %p71 = scmp.eq.s32.totalorder %s24, 0
      %p72 = por %p70, %p71
      %s74 = sadd.s32 %s73, 1
      %p77 = scmp.eq.s32.totalorder %s18, 1
      %p78 = scmp.ne.s32.totalorder %s73, %s75
      %p79 = scmp.eq.s32.totalorder %s18, 0
      %p80 = por %p78, %p79
      %p81 = scmp.ne.s32.totalorder %s73, %s75
      %p82 = scmp.eq.s32.totalorder %s23, 1
      %p83 = por %p81, %p82
      %p84 = scmp.ne.s32.totalorder %s75, %s76
      %p85 = scmp.eq.s32.totalorder %s23, 0
      %p86 = por %p84, %p85
      %p87 = scmp.ne.s32.totalorder %s75, %s76
      %p88 = scmp.eq.s32.totalorder %s24, 1
      %p89 = por %p87, %p88
      %p91 = scmp.ne.s32.totalorder %s76, %s90
      %p92 = scmp.eq.s32.totalorder %s24, 0
      %p93 = por %p91, %p92
      %s95 = sadd.s32 %s94, 1
      %p98 = scmp.eq.s32.totalorder %s18, 1
      %p99 = scmp.ne.s32.totalorder %s94, %s96
      %p100 = scmp.eq.s32.totalorder %s18, 0
      %p101 = por %p99, %p100
      %p102 = scmp.ne.s32.totalorder %s94, %s96
      %p103 = scmp.eq.s32.totalorder %s23, 1
      %p104 = por %p102, %p103
      %p105 = scmp.ne.s32.totalorder %s96, %s97
      %p106 = scmp.eq.s32.totalorder %s23, 0
      %p107 = por %p105, %p106
      %p108 = scmp.ne.s32.totalorder %s96, %s97
      %p109 = scmp.eq.s32.totalorder %s24, 1
      %p110 = por %p108, %p109
      %p112 = scmp.ne.s32.totalorder %s97, %s111
      %p113 = scmp.eq.s32.totalorder %s24, 0
      %p114 = por %p112, %p113
      %s116 = sadd.s32 %s115, 1
      %p119 = scmp.eq.s32.totalorder %s18, 1
      %p120 = scmp.ne.s32.totalorder %s115, %s117
      %p121 = scmp.eq.s32.totalorder %s18, 0
      %p122 = por %p120, %p121
      %p123 = scmp.ne.s32.totalorder %s115, %s117
      %p124 = scmp.eq.s32.totalorder %s23, 1
      %p125 = por %p123, %p124
      %p126 = scmp.ne.s32.totalorder %s117, %s118
      %p127 = scmp.eq.s32.totalorder %s23, 0
      %p128 = por %p126, %p127
      %p129 = scmp.ne.s32.totalorder %s117, %s118
      %p130 = scmp.eq.s32.totalorder %s24, 1
      %p131 = por %p129, %p130
      %p133 = scmp.ne.s32.totalorder %s118, %s132
      %p134 = scmp.eq.s32.totalorder %s24, 0
      %p135 = por %p133, %p134
      %s136 = ssub.s32 %s18, %s25
      %p137 = scmp.eq.s32.totalorder %s136, 0
      %s139 = sadd.s32 %s138, 1
      %s140 = scalar_select %p137, %s138, %s139
      %p143 = pneg %p137
      %p144 = scmp.eq.s32.totalorder %s18, 1
      %p145 = por %p143, %p144
      %p146 = scmp.ne.s32.totalorder %s138, %s141
      %p147 = scmp.eq.s32.totalorder %s18, 0
      %p148 = por %p146, %p147
      %p149 = scmp.ne.s32.totalorder %s138, %s141
      %p150 = scmp.eq.s32.totalorder %s23, 1
      %p151 = por %p149, %p150
      %p152 = scmp.ne.s32.totalorder %s141, %s142
      %p153 = scmp.eq.s32.totalorder %s23, 0
      %p154 = por %p152, %p153
      %p155 = scmp.ne.s32.totalorder %s141, %s142
      %p156 = scmp.eq.s32.totalorder %s24, 1
      %p157 = por %p155, %p156
      %p159 = scmp.ne.s32.totalorder %s142, %s158
      %p160 = scmp.eq.s32.totalorder %s24, 0
      %p161 = por %p159, %p160
      %p162 = scmp.le.s32.totalorder 1, %s18
      %p163 = scmp.lt.s32.totalorder %s18, 3
      %p164 = pnand %p162, %p163
      %p165 = pneg %p164
      // Predicated region
      $region9: #{tpu_custom_call.1} parent=5 // pred_check
        _
      $region10: #{tpu_custom_call.1} parent=5 // pred_check_branch
        %167 = sbr.rel (%p164) target = $region12
      $region11: #{tpu_custom_call.1} parent=5 // pred_region
        %s168 = ssub.s32 %s18, 1
        // Predicated region
        $region13: #{tpu_custom_call.1} parent=11 // pred_check
          %p169 = pneg %p65
        $region14: #{tpu_custom_call.1} parent=11 // pred_check_branch
          %171 = sbr.rel (%p169) target = $region16
        $region15: #{tpu_custom_call.1} parent=11 // pred_region
          _
        $region16: #{tpu_custom_call.1} parent=11 // pred_fallthru
          _
        // Predicated region
        $region17: #{tpu_custom_call.1} parent=11 // pred_check
          %p172 = pneg %p86
        $region18: #{tpu_custom_call.1} parent=11 // pred_check_branch
          %174 = sbr.rel (%p172) target = $region20
        $region19: #{tpu_custom_call.1} parent=11 // pred_region
          _
        $region20: #{tpu_custom_call.1} parent=11 // pred_fallthru
          _
        // Predicated region
        $region21: #{tpu_custom_call.1} parent=11 // pred_check
          %p175 = pneg %p107
        $region22: #{tpu_custom_call.1} parent=11 // pred_check_branch
          %177 = sbr.rel (%p175) target = $region24
        $region23: #{tpu_custom_call.1} parent=11 // pred_region
          %s179 = ssub.s32 512, 512
          %180 = vsyncadd [#allocation6], %s179
          %s181 = sshll.u32 [#allocation5], 4
          %s182 = int_to_ptr.vmem [resolvable:$true] %s181
          %187 = dma.hbm_to_vmem [thread:$0]  %s3, 512, %s182, [#allocation6], 128, 128, 8
        $region24: #{tpu_custom_call.1} parent=11 // pred_fallthru
          _
        // Predicated region
        $region25: #{tpu_custom_call.1} parent=11 // pred_check
          %p188 = pneg %p128
        $region26: #{tpu_custom_call.1} parent=11 // pred_check_branch
          %190 = sbr.rel (%p188) target = $region28
        $region27: #{tpu_custom_call.1} parent=11 // pred_region
          %s192 = ssub.s32 512, 512
          %193 = vsyncadd [#allocation6], %s192
          %s194 = sshll.u32 [#allocation7], 4
          %s195 = int_to_ptr.vmem [resolvable:$true] %s194
          %200 = dma.hbm_to_vmem [thread:$0]  %s4, 512, %s195, [#allocation6], 128, 128, 8
        $region28: #{tpu_custom_call.1} parent=11 // pred_fallthru
          _
      $region12: #{tpu_custom_call.1} parent=5 // pred_fallthru
        _
      %p201 = scmp.lt.s32.totalorder %s18, 2
      // Predicated region
      $region29: #{tpu_custom_call.1} parent=5 // pred_check
        %p202 = pneg %p201
      $region30: #{tpu_custom_call.1} parent=5 // pred_check_branch
        %204 = sbr.rel (%p202) target = $region32
      $region31: #{tpu_custom_call.1} parent=5 // pred_region
        // Predicated region
        $region33: #{tpu_custom_call.1} parent=31 // pred_check
          %p205 = pneg %p38
        $region34: #{tpu_custom_call.1} parent=31 // pred_check_branch
          %207 = sbr.rel (%p205) target = $region36
        $region35: #{tpu_custom_call.1} parent=31 // pred_region
          %s208 = sand.u32 %s28, 1
          %s209 = scalar_lea.sflag [#allocation3], %s208
          %s210 = sand.u32 %s28, 1
          %s211 = smul.addr %s210, 8
          %s212 = scalar_lea.vmem [#allocation2], %s211
          %s214 = ssub.s32 128, 128
          %215 = vsyncadd %s209, %s214
          %s216 = smul.addr %s18, 128
          %s217 = scalar_lea.hbm %s0, %s216
          %s219 = sshll.u32 %s212, 4
          %s220 = int_to_ptr.vmem [resolvable:$true] %s219
          %222 = dma.hbm_to_vmem [thread:$0]  %s217, 128, %s220, %s209
        $region36: #{tpu_custom_call.1} parent=31 // pred_fallthru
          _
      $region32: #{tpu_custom_call.1} parent=5 // pred_fallthru
        _
      %p223 = scmp.le.s32.totalorder 1, %s18
      %p224 = scmp.lt.s32.totalorder %s18, 3
      %p225 = pnand %p223, %p224
      %p226 = pneg %p225
      // Predicated region
      $region37: #{tpu_custom_call.1} parent=5 // pred_check
        _
      $region38: #{tpu_custom_call.1} parent=5 // pred_check_branch
        %228 = sbr.rel (%p225) target = $region40
      $region39: #{tpu_custom_call.1} parent=5 // pred_region
        %s229 = ssub.s32 %s18, 1
        %s230 = sand.u32 %s31, 1
        %s231 = scalar_lea.sflag [#allocation3], %s230
        %s232 = sand.u32 %s31, 1
        %s233 = smul.addr %s232, 8
        %s234 = scalar_lea.vmem [#allocation2], %s233
        // Predicated region
        $region41: #{tpu_custom_call.1} parent=39 // pred_check
          %p235 = pneg %p44
        $region42: #{tpu_custom_call.1} parent=39 // pred_check_branch
          %237 = sbr.rel (%p235) target = $region44
        $region43: #{tpu_custom_call.1} parent=39 // pred_region
          %238 = dma.done %s231, 128
        $region44: #{tpu_custom_call.1} parent=39 // pred_fallthru
          _
        // Predicated region
        $region45: #{tpu_custom_call.1} parent=39 // pred_check
          %p239 = pneg %p107
        $region46: #{tpu_custom_call.1} parent=39 // pred_check_branch
          %241 = sbr.rel (%p239) target = $region48
        $region47: #{tpu_custom_call.1} parent=39 // pred_region
          %242 = dma.done [#allocation6], 512
        $region48: #{tpu_custom_call.1} parent=39 // pred_fallthru
          _
        // Predicated region
        $region49: #{tpu_custom_call.1} parent=39 // pred_check
          %p243 = pneg %p128
        $region50: #{tpu_custom_call.1} parent=39 // pred_check_branch
          %245 = sbr.rel (%p243) target = $region52
        $region51: #{tpu_custom_call.1} parent=39 // pred_region
          %246 = dma.done [#allocation6], 512
        $region52: #{tpu_custom_call.1} parent=39 // pred_fallthru
          _
        %s247 = sand.u32 %s31, 1
        %s248 = scalar_lea.sflag [#allocation3], %s247
        %s249 = sand.u32 %s31, 1
        %s250 = smul.addr %s249, 8
        %s251 = scalar_lea.vmem [#allocation2], %s250
        %p252 = pneg %p44
        %p253 = pneg %p41
        %p254 = pneg %p65
        %p255 = pneg %p62
        %p256 = pneg %p86
        %p257 = pneg %p83
        %p258 = pneg %p107
        %p259 = pneg %p104
        %p260 = pneg %p128
        %p261 = pneg %p125
        %p262 = pneg %p154
        %p263 = pneg %p151
        %s264 = sand.u32 %s141, 1
        %s265 = scalar_lea.sflag [#allocation4], %s264
        %s266 = sand.u32 %s141, 1
        %s267 = smul.addr %s266, 2
        %s268 = scalar_lea.vmem [#allocation8], %s267
        %v269 = vld [vmem:[%s234] sm:$0xff]
        %vm270 = vcmask 261120
        %v271 = vsel %vm270, %v269, 0.0
        %272 = vadd.xlane.f32.xlu0 %v271
        %v273 = vpop.xlane.xlu0 %272
        %v274 = vrcp.pop 32.0
        %v275 = vmul.f32 %v273, %v274
        %v276 = vsub.f32 %v269, %v275
        %v277 = vmul.f32 %v276, %v276
        %v278 = vsel %vm270, %v277, 0.0
        %279 = vadd.xlane.f32.xlu0 %v278
        %v280 = vpop.xlane.xlu0 %279
        %v281 = vmul.f32 %v280, %v274
        %v282 = vadd.f32 %v281, 1e-05
        %v283 = vrsqrt.pop %v282
        %v284 = vmul.f32 %v276, %v283
        %v285 = vld [vmem:[%s1] sm:$0x1]
        %v287 = vlaneseq
        %v288 = vshrl.u32 %v287, 7
        %v289 = vsub.s32 0, %v288
        %v290 = vrot.slane %v285, %v289
        %v292 = vmul.f32 %v284, %v290
        %v293 = vld [vmem:[%s2] sm:$0x1]
        %v295 = vlaneseq
        %v296 = vshrl.u32 %v295, 7
        %v297 = vsub.s32 0, %v296
        %v298 = vrot.slane %v293, %v297
        %v300 = vadd.f32 %v292, %v298
        %v301 = vld [vmem:[#allocation5] sm:$0xff]
        %v302 = vld [vmem:[#allocation5 + $0x8] sm:$0xff]
        %v303 = vld [vmem:[#allocation5 + $0x10] sm:$0xff]
        %v304 = vld [vmem:[#allocation5 + $0x18] sm:$0xff]
        %v306 = vsel %vm270, %v300, 0
        %308 = vmatprep.subr.mxu0 0.0
        %309 = vmatpush1.msra.mxu0 %v301
        %310 = vmatprep.subr.mxu0 0.0
        %311 = vmatpush1.msra.mxu0 %v302
        %312 = vmatprep.subr.mxu0 0.0
        %313 = vmatpush1.msra.mxu0 %v303
        %314 = vmatprep.subr.mxu0 0.0
        %315 = vmatpush1.msra.mxu0 %v304
        %316 = vmatprep.subr.mxu0 0.0
        %317 = vmatpush1.msra.mxu0 0.0
        %318 = vmatprep.subr.mxu0 0.0
        %319 = vmatpush1.msra.mxu0 0.0
        %320 = vmatprep.subr.mxu0 0.0
        %321 = vmatpush1.msra.mxu0 0.0
        %322 = vmatprep.subr.mxu0 0.0
        %323 = vmatpush1.msra.mxu0 0.0
        %324 = vmatprep.subr.mxu0 0.0
        %325 = vmatpush1.msra.mxu0 0.0
        %326 = vmatprep.subr.mxu0 0.0
        %327 = vmatpush1.msra.mxu0 0.0
        %328 = vmatprep.subr.mxu0 0.0
        %329 = vmatpush1.msra.mxu0 0.0
        %330 = vmatprep.subr.mxu0 0.0
        %331 = vmatpush1.msra.mxu0 0.0
        %332 = vmatprep.subr.mxu0 0.0
        %333 = vmatpush1.msra.mxu0 0.0
        %334 = vmatprep.subr.mxu0 0.0
        %335 = vmatpush1.msra.mxu0 0.0
        %336 = vmatprep.subr.mxu0 0.0
        %337 = vmatpush1.msra.mxu0 0.0
        %338 = vmatprep.subr.mxu0 0.0
        %339 = vmatpush1.msra.mxu0 0.0
        %340 = vmatprep.subr.mxu0 0.0
        %341 = vmatpush1.msra.mxu0 0.0
        %342 = vmatprep.subr.mxu0 0.0
        %343 = vmatpush1.msra.mxu0 0.0
        %344 = vmatprep.subr.mxu0 0.0
        %345 = vmatpush1.msra.mxu0 0.0
        %346 = vmatprep.subr.mxu0 0.0
        %347 = vmatpush1.msra.mxu0 0.0
        %348 = vmatprep.subr.mxu0 0.0
        %349 = vmatpush1.msra.mxu0 0.0
        %350 = vmatprep.subr.mxu0 0.0
        %351 = vmatpush1.msra.mxu0 0.0
        %352 = vmatprep.subr.mxu0 0.0
        %353 = vmatpush1.msra.mxu0 0.0
        %354 = vmatprep.subr.mxu0 0.0
        %355 = vmatpush1.msra.mxu0 0.0
        %356 = vmatprep.subr.mxu0 0.0
        %357 = vmatpush1.msra.mxu0 0.0
        %358 = vmatprep.subr.mxu0 0.0
        %359 = vmatpush1.msra.mxu0 0.0
        %360 = vmatprep.subr.mxu0 0.0
        %361 = vmatpush1.msra.mxu0 0.0
        %362 = vmatprep.subr.mxu0 0.0
        %363 = vmatpush1.msra.mxu0 0.0
        %364 = vmatprep.subr.mxu0 0.0
        %365 = vmatpush1.msra.mxu0 0.0
        %366 = vmatprep.subr.mxu0 0.0
        %367 = vmatpush1.msra.mxu0 0.0
        %368 = vmatprep.subr.mxu0 0.0
        %369 = vmatpush1.msra.mxu0 0.0
        %370 = vmatprep.subr.mxu0 0.0
        %371 = vmatpush1.msra.mxu0 0.0
        %372 = vmatprep.mubr.f32.mxu0 0.0
        %373 = vmatmul.mubr.f32.gmra.mrb[0].mxu0 %v306
        %v374 = vpop.f32.mrb[0].mxu0
        %v375 = vadd.f32 0.0, %v374
        %v376 = vpop.f32.mrb[0].mxu0
        %377 = vdwg.mxu0
        %379 = vrot.lane.b32.xlu0 %v375, 96
        %v380 = vpop.permute.xlu0 %379
        %vm381 = vcmask 130048
        %v382 = vsel %vm381, %v375, 0
        %v384 = vsel %vm381, %v380, 0
        %386 = vmatprep.subr.mxu0 0.0
        %387 = vmatpush1.xpose.msra.mxu0 %v384
        %388 = vmatprep.subr.mxu0 0.0
        %389 = vmatpush1.xpose.msra.mxu0 0.0
        %390 = vmatprep.subr.mxu0 0.0
        %391 = vmatpush1.xpose.msra.mxu0 0.0
        %392 = vmatprep.subr.mxu0 0.0
        %393 = vmatpush1.xpose.msra.mxu0 0.0
        %394 = vmatprep.subr.mxu0 0.0
        %395 = vmatpush1.xpose.msra.mxu0 0.0
        %396 = vmatprep.subr.mxu0 0.0
        %397 = vmatpush1.xpose.msra.mxu0 0.0
        %398 = vmatprep.subr.mxu0 0.0
        %399 = vmatpush1.xpose.msra.mxu0 0.0
        %400 = vmatprep.subr.mxu0 0.0
        %401 = vmatpush1.xpose.msra.mxu0 0.0
        %402 = vmatprep.subr.mxu0 0.0
        %403 = vmatpush1.xpose.msra.mxu0 0.0
        %404 = vmatprep.subr.mxu0 0.0
        %405 = vmatpush1.xpose.msra.mxu0 0.0
        %406 = vmatprep.subr.mxu0 0.0
        %407 = vmatpush1.xpose.msra.mxu0 0.0
        %408 = vmatprep.subr.mxu0 0.0
        %409 = vmatpush1.xpose.msra.mxu0 0.0
        %410 = vmatprep.subr.mxu0 0.0
        %411 = vmatpush1.xpose.msra.mxu0 0.0
        %412 = vmatprep.subr.mxu0 0.0
        %413 = vmatpush1.xpose.msra.mxu0 0.0
        %414 = vmatprep.subr.mxu0 0.0
        %415 = vmatpush1.xpose.msra.mxu0 0.0
        %416 = vmatprep.subr.mxu0 0.0
        %417 = vmatpush1.xpose.msra.mxu0 0.0
        %418 = vmatprep.subr.mxu0 0.0
        %419 = vmatpush1.xpose.msra.mxu0 0.0
        %420 = vmatprep.subr.mxu0 0.0
        %421 = vmatpush1.xpose.msra.mxu0 0.0
        %422 = vmatprep.subr.mxu0 0.0
        %423 = vmatpush1.xpose.msra.mxu0 0.0
        %424 = vmatprep.subr.mxu0 0.0
        %425 = vmatpush1.xpose.msra.mxu0 0.0
        %426 = vmatprep.subr.mxu0 0.0
        %427 = vmatpush1.xpose.msra.mxu0 0.0
        %428 = vmatprep.subr.mxu0 0.0
        %429 = vmatpush1.xpose.msra.mxu0 0.0
        %430 = vmatprep.subr.mxu0 0.0
        %431 = vmatpush1.xpose.msra.mxu0 0.0
        %432 = vmatprep.subr.mxu0 0.0
        %433 = vmatpush1.xpose.msra.mxu0 0.0
        %434 = vmatprep.subr.mxu0 0.0
        %435 = vmatpush1.xpose.msra.mxu0 0.0
        %436 = vmatprep.subr.mxu0 0.0
        %437 = vmatpush1.xpose.msra.mxu0 0.0
        %438 = vmatprep.subr.mxu0 0.0
        %439 = vmatpush1.xpose.msra.mxu0 0.0
        %440 = vmatprep.subr.mxu0 0.0
        %441 = vmatpush1.xpose.msra.mxu0 0.0
        %442 = vmatprep.subr.mxu0 0.0
        %443 = vmatpush1.xpose.msra.mxu0 0.0
        %444 = vmatprep.subr.mxu0 0.0
        %445 = vmatpush1.xpose.msra.mxu0 0.0
        %446 = vmatprep.subr.mxu0 0.0
        %447 = vmatpush1.xpose.msra.mxu0 0.0
        %448 = vmatprep.subr.mxu0 0.0
        %449 = vmatpush1.xpose.msra.mxu0 0.0
        %450 = vmatprep.mubr.f32.mxu0 0.0
        %451 = vmatmul.mubr.f32.gmra.mrb[0].mxu0 %v382
        %v452 = vpop.f32.mrb[0].mxu0
        %v453 = vadd.f32 0.0, %v452
        %v454 = vpop.f32.mrb[0].mxu0
        %455 = vdwg.mxu0
        %vm456 = vcmask 64512
        %v457 = vsel %vm456, %v453, -inf
        %458 = vmax.xlane.f32.xlu0 %v457
        %v459 = vpop.xlane.xlu0 %458
        %v460 = vsub.f32 %v453, %v459
        %v461 = vmul.f32 %v460, 1.442695
        %v462 = vpow.pop %v461
        %v463 = vsel %vm456, %v462, 0.0
        %464 = vadd.xlane.f32.xlu0 %v463
        %v465 = vpop.xlane.xlu0 %464
        %v466 = vrcp.pop %v465
        %v467 = vmul.f32 %v465, %v466
        %v468 = vsub.f32 2.0, %v467
        %v469 = vmul.f32 %v466, %v468
        %v470 = vmul.f32 %v462, %v469
        %471 = vrot.lane.b32.xlu0 %v375, 64
        %v472 = vpop.permute.xlu0 %471
        %v475 = vsel %vm456, %v470, 0
        %477 = vmatprep.subr.mxu0 0.0
        %478 = vmatpush1.msra.mxu0 %v472
        %479 = vmatprep.subr.mxu0 0.0
        %480 = vmatpush1.msra.mxu0 0.0
        %481 = vmatprep.subr.mxu0 0.0
        %482 = vmatpush1.msra.mxu0 0.0
        %483 = vmatprep.subr.mxu0 0.0
        %484 = vmatpush1.msra.mxu0 0.0
        %485 = vmatprep.subr.mxu0 0.0
        %486 = vmatpush1.msra.mxu0 0.0
        %487 = vmatprep.subr.mxu0 0.0
        %488 = vmatpush1.msra.mxu0 0.0
        %489 = vmatprep.subr.mxu0 0.0
        %490 = vmatpush1.msra.mxu0 0.0
        %491 = vmatprep.subr.mxu0 0.0
        %492 = vmatpush1.msra.mxu0 0.0
        %493 = vmatprep.subr.mxu0 0.0
        %494 = vmatpush1.msra.mxu0 0.0
        %495 = vmatprep.subr.mxu0 0.0
        %496 = vmatpush1.msra.mxu0 0.0
        %497 = vmatprep.subr.mxu0 0.0
        %498 = vmatpush1.msra.mxu0 0.0
        %499 = vmatprep.subr.mxu0 0.0
        %500 = vmatpush1.msra.mxu0 0.0
        %501 = vmatprep.subr.mxu0 0.0
        %502 = vmatpush1.msra.mxu0 0.0
        %503 = vmatprep.subr.mxu0 0.0
        %504 = vmatpush1.msra.mxu0 0.0
        %505 = vmatprep.subr.mxu0 0.0
        %506 = vmatpush1.msra.mxu0 0.0
        %507 = vmatprep.subr.mxu0 0.0
        %508 = vmatpush1.msra.mxu0 0.0
        %509 = vmatprep.subr.mxu0 0.0
        %510 = vmatpush1.msra.mxu0 0.0
        %511 = vmatprep.subr.mxu0 0.0
        %512 = vmatpush1.msra.mxu0 0.0
        %513 = vmatprep.subr.mxu0 0.0
        %514 = vmatpush1.msra.mxu0 0.0
        %515 = vmatprep.subr.mxu0 0.0
        %516 = vmatpush1.msra.mxu0 0.0
        %517 = vmatprep.subr.mxu0 0.0
        %518 = vmatpush1.msra.mxu0 0.0
        %519 = vmatprep.subr.mxu0 0.0
        %520 = vmatpush1.msra.mxu0 0.0
        %521 = vmatprep.subr.mxu0 0.0
        %522 = vmatpush1.msra.mxu0 0.0
        %523 = vmatprep.subr.mxu0 0.0
        %524 = vmatpush1.msra.mxu0 0.0
        %525 = vmatprep.subr.mxu0 0.0
        %526 = vmatpush1.msra.mxu0 0.0
        %527 = vmatprep.subr.mxu0 0.0
        %528 = vmatpush1.msra.mxu0 0.0
        %529 = vmatprep.subr.mxu0 0.0
        %530 = vmatpush1.msra.mxu0 0.0
        %531 = vmatprep.subr.mxu0 0.0
        %532 = vmatpush1.msra.mxu0 0.0
        %533 = vmatprep.subr.mxu0 0.0
        %534 = vmatpush1.msra.mxu0 0.0
        %535 = vmatprep.subr.mxu0 0.0
        %536 = vmatpush1.msra.mxu0 0.0
        %537 = vmatprep.subr.mxu0 0.0
        %538 = vmatpush1.msra.mxu0 0.0
        %539 = vmatprep.subr.mxu0 0.0
        %540 = vmatpush1.msra.mxu0 0.0
        %541 = vmatprep.mubr.f32.mxu0 0.0
        %542 = vmatmul.mubr.f32.gmra.mrb[0].mxu0 %v475
        %v543 = vpop.f32.mrb[0].mxu0
        %v544 = vadd.f32 0.0, %v543
        %v545 = vpop.f32.mrb[0].mxu0
        %546 = vdwg.mxu0
        %547 = vrot.lane.b32.xlu0 %v375, 112
        %v548 = vpop.permute.xlu0 %547
        %549 = vrot.lane.b32.xlu0 %v375, 80
        %v550 = vpop.permute.xlu0 %549
        %v551 = vsel %vm381, %v548, 0
        %v553 = vsel %vm381, %v550, 0
        %555 = vmatprep.subr.mxu0 0.0
        %556 = vmatpush1.xpose.msra.mxu0 %v553
        %557 = vmatprep.subr.mxu0 0.0
        %558 = vmatpush1.xpose.msra.mxu0 0.0
        %559 = vmatprep.subr.mxu0 0.0
        %560 = vmatpush1.xpose.msra.mxu0 0.0
        %561 = vmatprep.subr.mxu0 0.0
        %562 = vmatpush1.xpose.msra.mxu0 0.0
        %563 = vmatprep.subr.mxu0 0.0
        %564 = vmatpush1.xpose.msra.mxu0 0.0
        %565 = vmatprep.subr.mxu0 0.0
        %566 = vmatpush1.xpose.msra.mxu0 0.0
        %567 = vmatprep.subr.mxu0 0.0
        %568 = vmatpush1.xpose.msra.mxu0 0.0
        %569 = vmatprep.subr.mxu0 0.0
        %570 = vmatpush1.xpose.msra.mxu0 0.0
        %571 = vmatprep.subr.mxu0 0.0
        %572 = vmatpush1.xpose.msra.mxu0 0.0
        %573 = vmatprep.subr.mxu0 0.0
        %574 = vmatpush1.xpose.msra.mxu0 0.0
        %575 = vmatprep.subr.mxu0 0.0
        %576 = vmatpush1.xpose.msra.mxu0 0.0
        %577 = vmatprep.subr.mxu0 0.0
        %578 = vmatpush1.xpose.msra.mxu0 0.0
        %579 = vmatprep.subr.mxu0 0.0
        %580 = vmatpush1.xpose.msra.mxu0 0.0
        %581 = vmatprep.subr.mxu0 0.0
        %582 = vmatpush1.xpose.msra.mxu0 0.0
        %583 = vmatprep.subr.mxu0 0.0
        %584 = vmatpush1.xpose.msra.mxu0 0.0
        %585 = vmatprep.subr.mxu0 0.0
        %586 = vmatpush1.xpose.msra.mxu0 0.0
        %587 = vmatprep.subr.mxu0 0.0
        %588 = vmatpush1.xpose.msra.mxu0 0.0
        %589 = vmatprep.subr.mxu0 0.0
        %590 = vmatpush1.xpose.msra.mxu0 0.0
        %591 = vmatprep.subr.mxu0 0.0
        %592 = vmatpush1.xpose.msra.mxu0 0.0
        %593 = vmatprep.subr.mxu0 0.0
        %594 = vmatpush1.xpose.msra.mxu0 0.0
        %595 = vmatprep.subr.mxu0 0.0
        %596 = vmatpush1.xpose.msra.mxu0 0.0
        %597 = vmatprep.subr.mxu0 0.0
        %598 = vmatpush1.xpose.msra.mxu0 0.0
        %599 = vmatprep.subr.mxu0 0.0
        %600 = vmatpush1.xpose.msra.mxu0 0.0
        %601 = vmatprep.subr.mxu0 0.0
        %602 = vmatpush1.xpose.msra.mxu0 0.0
        %603 = vmatprep.subr.mxu0 0.0
        %604 = vmatpush1.xpose.msra.mxu0 0.0
        %605 = vmatprep.subr.mxu0 0.0
        %606 = vmatpush1.xpose.msra.mxu0 0.0
        %607 = vmatprep.subr.mxu0 0.0
        %608 = vmatpush1.xpose.msra.mxu0 0.0
        %609 = vmatprep.subr.mxu0 0.0
        %610 = vmatpush1.xpose.msra.mxu0 0.0
        %611 = vmatprep.subr.mxu0 0.0
        %612 = vmatpush1.xpose.msra.mxu0 0.0
        %613 = vmatprep.subr.mxu0 0.0
        %614 = vmatpush1.xpose.msra.mxu0 0.0
        %615 = vmatprep.subr.mxu0 0.0
        %616 = vmatpush1.xpose.msra.mxu0 0.0
        %617 = vmatprep.subr.mxu0 0.0
        %618 = vmatpush1.xpose.msra.mxu0 0.0
        %619 = vmatprep.mubr.f32.mxu0 0.0
        %620 = vmatmul.mubr.f32.gmra.mrb[0].mxu0 %v551
        %v621 = vpop.f32.mrb[0].mxu0
        %v622 = vadd.f32 0.0, %v621
        %v623 = vpop.f32.mrb[0].mxu0
        %624 = vdwg.mxu0
        %v625 = vsel %vm456, %v622, -inf
        %626 = vmax.xlane.f32.xlu0 %v625
        %v627 = vpop.xlane.xlu0 %626
        %v628 = vsub.f32 %v622, %v627
        %v629 = vmul.f32 %v628, 1.442695
        %v630 = vpow.pop %v629
        %v631 = vsel %vm456, %v630, 0.0
        %632 = vadd.xlane.f32.xlu0 %v631
        %v633 = vpop.xlane.xlu0 %632
        %v634 = vrcp.pop %v633
        %v635 = vmul.f32 %v633, %v634
        %v636 = vsub.f32 2.0, %v635
        %v637 = vmul.f32 %v634, %v636
        %v638 = vmul.f32 %v630, %v637
        %639 = vrot.lane.b32.xlu0 %v375, 48
        %v640 = vpop.permute.xlu0 %639
        %v643 = vsel %vm456, %v638, 0
        %645 = vmatprep.subr.mxu0 0.0
        %646 = vmatpush1.msra.mxu0 %v640
        %647 = vmatprep.subr.mxu0 0.0
        %648 = vmatpush1.msra.mxu0 0.0
        %649 = vmatprep.subr.mxu0 0.0
        %650 = vmatpush1.msra.mxu0 0.0
        %651 = vmatprep.subr.mxu0 0.0
        %652 = vmatpush1.msra.mxu0 0.0
        %653 = vmatprep.subr.mxu0 0.0
        %654 = vmatpush1.msra.mxu0 0.0
        %655 = vmatprep.subr.mxu0 0.0
        %656 = vmatpush1.msra.mxu0 0.0
        %657 = vmatprep.subr.mxu0 0.0
        %658 = vmatpush1.msra.mxu0 0.0
        %659 = vmatprep.subr.mxu0 0.0
        %660 = vmatpush1.msra.mxu0 0.0
        %661 = vmatprep.subr.mxu0 0.0
        %662 = vmatpush1.msra.mxu0 0.0
        %663 = vmatprep.subr.mxu0 0.0
        %664 = vmatpush1.msra.mxu0 0.0
        %665 = vmatprep.subr.mxu0 0.0
        %666 = vmatpush1.msra.mxu0 0.0
        %667 = vmatprep.subr.mxu0 0.0
        %668 = vmatpush1.msra.mxu0 0.0
        %669 = vmatprep.subr.mxu0 0.0
        %670 = vmatpush1.msra.mxu0 0.0
        %671 = vmatprep.subr.mxu0 0.0
        %672 = vmatpush1.msra.mxu0 0.0
        %673 = vmatprep.subr.mxu0 0.0
        %674 = vmatpush1.msra.mxu0 0.0
        %675 = vmatprep.subr.mxu0 0.0
        %676 = vmatpush1.msra.mxu0 0.0
        %677 = vmatprep.subr.mxu0 0.0
        %678 = vmatpush1.msra.mxu0 0.0
        %679 = vmatprep.subr.mxu0 0.0
        %680 = vmatpush1.msra.mxu0 0.0
        %681 = vmatprep.subr.mxu0 0.0
        %682 = vmatpush1.msra.mxu0 0.0
        %683 = vmatprep.subr.mxu0 0.0
        %684 = vmatpush1.msra.mxu0 0.0
        %685 = vmatprep.subr.mxu0 0.0
        %686 = vmatpush1.msra.mxu0 0.0
        %687 = vmatprep.subr.mxu0 0.0
        %688 = vmatpush1.msra.mxu0 0.0
        %689 = vmatprep.subr.mxu0 0.0
        %690 = vmatpush1.msra.mxu0 0.0
        %691 = vmatprep.subr.mxu0 0.0
        %692 = vmatpush1.msra.mxu0 0.0
        %693 = vmatprep.subr.mxu0 0.0
        %694 = vmatpush1.msra.mxu0 0.0
        %695 = vmatprep.subr.mxu0 0.0
        %696 = vmatpush1.msra.mxu0 0.0
        %697 = vmatprep.subr.mxu0 0.0
        %698 = vmatpush1.msra.mxu0 0.0
        %699 = vmatprep.subr.mxu0 0.0
        %700 = vmatpush1.msra.mxu0 0.0
        %701 = vmatprep.subr.mxu0 0.0
        %702 = vmatpush1.msra.mxu0 0.0
        %703 = vmatprep.subr.mxu0 0.0
        %704 = vmatpush1.msra.mxu0 0.0
        %705 = vmatprep.subr.mxu0 0.0
        %706 = vmatpush1.msra.mxu0 0.0
        %707 = vmatprep.subr.mxu0 0.0
        %708 = vmatpush1.msra.mxu0 0.0
        %709 = vmatprep.mubr.f32.mxu0 0.0
        %710 = vmatmul.mubr.f32.gmra.mrb[0].mxu0 %v643
        %v711 = vpop.f32.mrb[0].mxu0
        %v712 = vadd.f32 0.0, %v711
        %v713 = vpop.f32.mrb[0].mxu0
        %714 = vdwg.mxu0
        %716 = vrot.lane.b32.xlu0 %v712, 16
        %v717 = vpop.permute.xlu0 %716
        %v719 = vsel %vm381, %v544, %v717
        %v720 = vld [vmem:[#allocation7] sm:$0xff]
        %v721 = vld [vmem:[#allocation7 + $0x8] sm:$0xff]
        %v722 = vld [vmem:[#allocation7 + $0x10] sm:$0xff]
        %v723 = vld [vmem:[#allocation7 + $0x18] sm:$0xff]
        %v725 = vsel %vm270, %v719, 0
        %727 = vmatprep.subr.mxu0 0.0
        %728 = vmatpush1.msra.mxu0 %v720
        %729 = vmatprep.subr.mxu0 0.0
        %730 = vmatpush1.msra.mxu0 %v721
        %731 = vmatprep.subr.mxu0 0.0
        %732 = vmatpush1.msra.mxu0 %v722
        %733 = vmatprep.subr.mxu0 0.0
        %734 = vmatpush1.msra.mxu0 %v723
        %735 = vmatprep.subr.mxu0 0.0
        %736 = vmatpush1.msra.mxu0 0.0
        %737 = vmatprep.subr.mxu0 0.0
        %738 = vmatpush1.msra.mxu0 0.0
        %739 = vmatprep.subr.mxu0 0.0
        %740 = vmatpush1.msra.mxu0 0.0
        %741 = vmatprep.subr.mxu0 0.0
        %742 = vmatpush1.msra.mxu0 0.0
        %743 = vmatprep.subr.mxu0 0.0
        %744 = vmatpush1.msra.mxu0 0.0
        %745 = vmatprep.subr.mxu0 0.0
        %746 = vmatpush1.msra.mxu0 0.0
        %747 = vmatprep.subr.mxu0 0.0
        %748 = vmatpush1.msra.mxu0 0.0
        %749 = vmatprep.subr.mxu0 0.0
        %750 = vmatpush1.msra.mxu0 0.0
        %751 = vmatprep.subr.mxu0 0.0
        %752 = vmatpush1.msra.mxu0 0.0
        %753 = vmatprep.subr.mxu0 0.0
        %754 = vmatpush1.msra.mxu0 0.0
        %755 = vmatprep.subr.mxu0 0.0
        %756 = vmatpush1.msra.mxu0 0.0
        %757 = vmatprep.subr.mxu0 0.0
        %758 = vmatpush1.msra.mxu0 0.0
        %759 = vmatprep.subr.mxu0 0.0
        %760 = vmatpush1.msra.mxu0 0.0
        %761 = vmatprep.subr.mxu0 0.0
        %762 = vmatpush1.msra.mxu0 0.0
        %763 = vmatprep.subr.mxu0 0.0
        %764 = vmatpush1.msra.mxu0 0.0
        %765 = vmatprep.subr.mxu0 0.0
        %766 = vmatpush1.msra.mxu0 0.0
        %767 = vmatprep.subr.mxu0 0.0
        %768 = vmatpush1.msra.mxu0 0.0
        %769 = vmatprep.subr.mxu0 0.0
        %770 = vmatpush1.msra.mxu0 0.0
        %771 = vmatprep.subr.mxu0 0.0
        %772 = vmatpush1.msra.mxu0 0.0
        %773 = vmatprep.subr.mxu0 0.0
        %774 = vmatpush1.msra.mxu0 0.0
        %775 = vmatprep.subr.mxu0 0.0
        %776 = vmatpush1.msra.mxu0 0.0
        %777 = vmatprep.subr.mxu0 0.0
        %778 = vmatpush1.msra.mxu0 0.0
        %779 = vmatprep.subr.mxu0 0.0
        %780 = vmatpush1.msra.mxu0 0.0
        %781 = vmatprep.subr.mxu0 0.0
        %782 = vmatpush1.msra.mxu0 0.0
        %783 = vmatprep.subr.mxu0 0.0
        %784 = vmatpush1.msra.mxu0 0.0
        %785 = vmatprep.subr.mxu0 0.0
        %786 = vmatpush1.msra.mxu0 0.0
        %787 = vmatprep.subr.mxu0 0.0
        %788 = vmatpush1.msra.mxu0 0.0
        %789 = vmatprep.subr.mxu0 0.0
        %790 = vmatpush1.msra.mxu0 0.0
        %791 = vmatprep.mubr.f32.mxu0 0.0
        %792 = vmatmul.mubr.f32.gmra.mrb[0].mxu0 %v725
        %v793 = vpop.f32.mrb[0].mxu0
        %v794 = vadd.f32 0.0, %v793
        %v795 = vpop.f32.mrb[0].mxu0
        %796 = vdwg.mxu0
        %v798 = vrot.slane %v794, 1
        %799 = vrot.lane.b32.xlu0 %v798, 32
        %v800 = vpop.permute.xlu0 %799
        %v802 = vrot.slane %v794, 2
        %803 = vrot.lane.b32.xlu0 %v802, 64
        %v804 = vpop.permute.xlu0 %803
        %v806 = vrot.slane %v794, 3
        %807 = vrot.lane.b32.xlu0 %v806, 96
        %v808 = vpop.permute.xlu0 %807
        %v810 = vrot.slane %v794, 4
        %v812 = vrot.slane %v794, 5
        %813 = vrot.lane.b32.xlu0 %v812, 32
        %v814 = vpop.permute.xlu0 %813
        %v816 = vrot.slane %v794, 6
        %817 = vrot.lane.b32.xlu0 %v816, 64
        %v818 = vpop.permute.xlu0 %817
        %v820 = vrot.slane %v794, 7
        %821 = vrot.lane.b32.xlu0 %v820, 96
        %v822 = vpop.permute.xlu0 %821
        %v824 = vsel %vm270, %v794, %v800
        %vm825 = vcmask 523264
        %v826 = vsel %vm825, %v824, %v804
        %vm827 = vcmask 785408
        %v828 = vsel %vm827, %v826, %v808
        %v829 = vsel %vm270, %v810, %v814
        %v830 = vsel %vm825, %v829, %v818
        %v831 = vsel %vm827, %v830, %v822
        %v834 = vcombine.low %v828, %v831
        %v836 = vunpack.c.l.s4 1966171168
        %v837 = vunpack.c.0.s8 %v836
        %v838 = vlaneseq
        %v839 = vshrl.u32 %v838, 7
        %v840 = vsub.s32 %v837, %v839
        %v841 = vrot.slane %v834, %v840
        %v843 = vunpack.c.l.s4 1966171168
        %v844 = vunpack.c.0.s8 %v843
        %v845 = vlaneseq
        %v846 = vshrl.u32 %v845, 7
        %v847 = vsub.s32 %v844, %v846
        %v848 = vrot.slane %v841, %v847
        %v850 = vlaneseq
        %vm851 = vcmp.ge.s32.totalorder %v850, 0
        %vm852 = vcmp.lt.s32.totalorder %v850, 256
        %vm853 = vmand %vm851, %vm852
        %854 = vst.msk [vmem:[%s268] sm:$0x3] %vm853, %v848
        %s855 = sand.u32 %s141, 1
        %s856 = scalar_lea.sflag [#allocation4], %s855
        %s857 = sand.u32 %s141, 1
        %s858 = smul.addr %s857, 2
        %s859 = scalar_lea.vmem [#allocation8], %s858
        // Predicated region
        $region53: #{tpu_custom_call.1} parent=39 // pred_check
          %p860 = pneg %p151
        $region54: #{tpu_custom_call.1} parent=39 // pred_check_branch
          %862 = sbr.rel (%p860) target = $region56
        $region55: #{tpu_custom_call.1} parent=39 // pred_region
          %s864 = ssub.s32 32, 32
          %865 = vsyncadd %s856, %s864
          %s866 = smul.addr %s23, 2
          %s867 = smul.addr %s866, 16
          %s868 = scalar_lea.hbm %s5, %s867
          %s870 = sshll.u32 %s859, 4
          %s871 = int_to_ptr.vmem [resolvable:$true] %s870
          %873 = dma.vmem_to_hbm [thread:$0]  %s871, 32, %s868, %s856
        $region56: #{tpu_custom_call.1} parent=39 // pred_fallthru
          _
      $region40: #{tpu_custom_call.1} parent=5 // pred_fallthru
        _
      %p874 = scmp.le.s32.totalorder 2, %s18
      // Predicated region
      $region57: #{tpu_custom_call.1} parent=5 // pred_check
        %p875 = pneg %p874
      $region58: #{tpu_custom_call.1} parent=5 // pred_check_branch
        %877 = sbr.rel (%p875) target = $region60
      $region59: #{tpu_custom_call.1} parent=5 // pred_region
        %s878 = ssub.s32 %s18, 2
        // Predicated region
        $region61: #{tpu_custom_call.1} parent=59 // pred_check
          %p879 = pneg %p157
        $region62: #{tpu_custom_call.1} parent=59 // pred_check_branch
          %881 = sbr.rel (%p879) target = $region64
        $region63: #{tpu_custom_call.1} parent=59 // pred_region
          %s882 = sand.u32 %s142, 1
          %s883 = scalar_lea.sflag [#allocation4], %s882
          %s884 = sand.u32 %s142, 1
          %s885 = smul.addr %s884, 2
          %s886 = scalar_lea.vmem [#allocation8], %s885
          %887 = dma.done %s883, 32
        $region64: #{tpu_custom_call.1} parent=59 // pred_fallthru
          _
      $region60: #{tpu_custom_call.1} parent=5 // pred_fallthru
        _
    $region6: #{tpu_custom_call.1} parent=1 // loop_footer
      %s22 = sadd.s32 1, %s18
    $region7: #{tpu_custom_call.1} parent=1 // loop_footer_branch
      %17 = sbr.rel target = $region3
    $region8: #{tpu_custom_call.1} parent=1 // loop_exit
      _
    %888 = vsyncpa [#allocation3], 1
    %s889 = scalar_lea.sflag [#allocation3], 1
    %890 = vsyncpa %s889, 1
    %891 = vsyncpa [#allocation6], 1
    %892 = vsyncpa [#allocation4], 1
    %s893 = scalar_lea.sflag [#allocation4], 1
    %894 = vsyncpa %s893, 1

</llo_original>
